<compile_context>
chip_gen: v7x
topology: tpu7x:2x2x1
jax: 0.10.0
libtpu: 0.0.40
codegen_flags: <defaults>
</compile_context>

<pallas_src>
import functools

import jax
import jax.numpy as jnp
from jax.experimental import pallas as pl
from jax.experimental.pallas import tpu as pltpu

IN_DIM = 310
IN_PAD = 384          # 310 padded to 3*128 -> lane-aligned x tiles, clean MXU K
HID = 128
OUT_DIM = 3
OUT_PAD = 128         # lane-dense output; wrapper slices [:, :3]
EPS = 1e-5
TILE_B = 256          # batch tile (M dim for the MXU); >=256 fills v6e/v7x MXU


def _round_up(x, m):
    return (x + m - 1) // m * m


# ----------------------------- kernels --------------------------------------

def _row_mask(tb, batch, tile_idx):
    """(tb, 1) f32 mask: 1.0 for rows that belong to the real (unpadded) batch."""
    row = tile_idx * tb + jax.lax.broadcasted_iota(jnp.int32, (tb, 1), 0)
    return (row < batch).astype(jnp.float32)


def fc1_kernel(x_ref, w_ref, b_ref, h_ref, sum_ref, ssq_ref, *, tb, batch):
    """h1 = relu(x @ W1 + b1); emit masked per-tile sum / sum-of-squares."""
    i = pl.program_id(0)
    h = jnp.dot(x_ref[...], w_ref[...], preferred_element_type=jnp.float32) + b_ref[...]
    h = jnp.maximum(h, 0.0)
    h_ref[...] = h
    hm = h * _row_mask(tb, batch, i)
    sum_ref[...] = jnp.sum(hm, axis=0, keepdims=True)[None]
    ssq_ref[...] = jnp.sum(hm * h, axis=0, keepdims=True)[None]


def fc2_kernel(h1_ref, norm_ref, w_ref, b_ref, h_ref, sum_ref, ssq_ref, *, tb, batch):
    """h2 = relu(bn1(h1) @ W2' + b2'); emit masked per-tile stats for bn2."""
    i = pl.program_id(0)
    hn = h1_ref[...] * norm_ref[0:1, :] + norm_ref[1:2, :]       # (h1 - mu1) * rstd1
    h = jnp.dot(hn, w_ref[...], preferred_element_type=jnp.float32) + b_ref[...]
    h = jnp.maximum(h, 0.0)
    h_ref[...] = h
    hm = h * _row_mask(tb, batch, i)
    sum_ref[...] = jnp.sum(hm, axis=0, keepdims=True)[None]
    ssq_ref[...] = jnp.sum(hm * h, axis=0, keepdims=True)[None]


def fc3_kernel(h2_ref, norm_ref, w_ref, b_ref, o_ref):
    """out = bn2(h2) @ W3' + b3'  (lane-dense 128-wide store; cols 3..127 zero)."""
    hn = h2_ref[...] * norm_ref[0:1, :] + norm_ref[1:2, :]       # (h2 - mu2) * rstd2
    o_ref[...] = jnp.dot(hn, w_ref[...], preferred_element_type=jnp.float32) + b_ref[...]


# ----------------------------- wrapper ---------------------------------------

def _finalize_stats(sum_p, ssq_p, batch):
    """Per-tile partials (NT,1,128) -> (2,128) [scale; shift] for y = h*scale + shift."""
    s = jnp.sum(sum_p, axis=0)                     # (1, 128)
    q = jnp.sum(ssq_p, axis=0)                     # (1, 128)
    mean = s / batch
    var = jnp.maximum(q / batch - mean * mean, 0.0)   # biased var (BN training mode)
    rstd = jax.lax.rsqrt(var + EPS)
    return jnp.concatenate([rstd, -mean * rstd], axis=0)   # (2, 128)


def dumbnet_forward(x, prepped, *, tile_b=TILE_B):
    """x: (B, 310) f32 -> (B, 3) f32 logits (PyTorch BatchNorm1d training mode)."""
    w1p, b1, w2f, b2f, w3p, b3p = prepped
    B = x.shape[0]

    tb = min(tile_b, _round_up(B, 8))
    b_pad = _round_up(B, tb)
    nt = b_pad // tb

    # Pad once: batch rows -> b_pad, input features 310 -> 384 (zeros).
    xp = jnp.zeros((b_pad, IN_PAD), jnp.float32).at[:B, :IN_DIM].set(x)

    cparams = pltpu.CompilerParams(dimension_semantics=("parallel",),
                                   vmem_limit_bytes=32 * 1024 * 1024)

    act_spec = pl.BlockSpec((tb, HID), lambda i: (i, 0))
    stat_spec = pl.BlockSpec((1, 1, HID), lambda i: (i, 0, 0))
    stat_shape = jax.ShapeDtypeStruct((nt, 1, HID), jnp.float32)
    resident = lambda shape: pl.BlockSpec(shape, lambda i: (0,) * len(shape))

    # -------- stage 1: fc1 + ReLU, bn1 partial stats --------
    h1, s1, q1 = pl.pallas_call(
        functools.partial(fc1_kernel, tb=tb, batch=B),
        grid=(nt,),
        in_specs=[pl.BlockSpec((tb, IN_PAD), lambda i: (i, 0)),
                  resident((IN_PAD, HID)),
                  resident((1, HID))],
        out_specs=(act_spec, stat_spec, stat_spec),
        out_shape=(jax.ShapeDtypeStruct((b_pad, HID), jnp.float32),
                   stat_shape, stat_shape),
        compiler_params=cparams,
        cost_estimate=pl.CostEstimate(
            flops=2 * b_pad * IN_PAD * HID, transcendentals=0,
            bytes_accessed=4 * (b_pad * IN_PAD + IN_PAD * HID + 2 * b_pad * HID)),
    )(xp, w1p, b1)
    norm1 = _finalize_stats(s1, q1, B)

    # -------- stage 2: bn1 normalize + fc2 + ReLU, bn2 partial stats --------
    h2, s2, q2 = pl.pallas_call(
        functools.partial(fc2_kernel, tb=tb, batch=B),
        grid=(nt,),
        in_specs=[act_spec,
                  resident((2, HID)),
                  resident((HID, HID)),
                  resident((1, HID))],
        out_specs=(act_spec, stat_spec, stat_spec),
        out_shape=(jax.ShapeDtypeStruct((b_pad, HID), jnp.float32),
                   stat_shape, stat_shape),
        compiler_params=cparams,
        cost_estimate=pl.CostEstimate(
            flops=2 * b_pad * HID * HID, transcendentals=0,
            bytes_accessed=4 * (2 * b_pad * HID + HID * HID + b_pad * HID)),
    )(h1, norm1, w2f, b2f)
    norm2 = _finalize_stats(s2, q2, B)

    # -------- stage 3: bn2 normalize + fc3 (lane-dense 128-wide output) --------
    out = pl.pallas_call(
        fc3_kernel,
        grid=(nt,),
        in_specs=[act_spec,
                  resident((2, HID)),
                  resident((HID, OUT_PAD)),
                  resident((1, OUT_PAD))],
        out_specs=pl.BlockSpec((tb, OUT_PAD), lambda i: (i, 0)),
        out_shape=jax.ShapeDtypeStruct((b_pad, OUT_PAD), jnp.float32),
        compiler_params=cparams,
        cost_estimate=pl.CostEstimate(
            flops=2 * b_pad * HID * OUT_PAD, transcendentals=0,
            bytes_accessed=4 * (b_pad * HID + HID * OUT_PAD + b_pad * OUT_PAD)),
    )(h2, norm2, w3p, b3p)

    return out[:B, :OUT_DIM]


# ------------------------- params & reference --------------------------------

def init_params(key):
    """PyTorch-default-like init (Linear: U(+-1/sqrt(fan_in)); BN: gamma=1, beta=0).
    Linear weights stored transposed as (in, out)."""
    ks = jax.random.split(key, 6)

    def linear(kw, kb, fan_in, fan_out):
        bound = 1.0 / jnp.sqrt(float(fan_in))
        w = jax.random.uniform(kw, (fan_in, fan_out), jnp.float32, -bound, bound)
        b = jax.random.uniform(kb, (1, fan_out), jnp.float32, -bound, bound)
        return w, b

    w1, b1 = linear(ks[0], ks[1], IN_DIM, HID)
    w2, b2 = linear(ks[2], ks[3], HID, HID)
    w3, b3 = linear(ks[4], ks[5], HID, OUT_DIM)
    g1 = jnp.ones((1, HID), jnp.float32); be1 = jnp.zeros((1, HID), jnp.float32)
    g2 = jnp.ones((1, HID), jnp.float32); be2 = jnp.zeros((1, HID), jnp.float32)
    return (w1, b1, g1, be1, w2, b2, g2, be2, w3, b3)


def prep_params(params):
    """One-time (amortized) layout/algebra prep:
       * zero-pad W1 rows 310 -> 384 to match the lane-padded x,
       * fold BN affine (gamma, beta) into the following linear layer:
           (xn*g + be) @ W + b  ==  xn @ (g^T * W) + (be @ W + b),
       * zero-pad W3/b3 columns 3 -> 128 for a lane-dense kernel store."""
    (w1, b1, g1, be1, w2, b2, g2, be2, w3, b3) = params
    w1p = jnp.zeros((IN_PAD, HID), jnp.float32).at[:IN_DIM, :].set(w1)
    w2f = w2 * g1.reshape(HID, 1)
    b2f = be1 @ w2 + b2
    w3f = w3 * g2.reshape(HID, 1)
    b3f = be2 @ w3 + b3
    w3p = jnp.zeros((HID, OUT_PAD), jnp.float32).at[:, :OUT_DIM].set(w3f)
    b3p = jnp.zeros((1, OUT_PAD), jnp.float32).at[:, :OUT_DIM].set(b3f)
    return (w1p, b1, w2f, b2f, w3p, b3p)


def reference_forward(x, params):
    (w1, b1, g1, be1, w2, b2, g2, be2, w3, b3) = params
    h = jnp.maximum(x @ w1 + b1, 0.0)
    mu = h.mean(0, keepdims=True)
    var = ((h - mu) ** 2).mean(0, keepdims=True)
    h = (h - mu) / jnp.sqrt(var + EPS) * g1 + be1
    h = jnp.maximum(h @ w2 + b2, 0.0)
    mu = h.mean(0, keepdims=True)
    var = ((h - mu) ** 2).mean(0, keepdims=True)
    h = (h - mu) / jnp.sqrt(var + EPS) * g2 + be2
    return h @ w3 + b3


if __name__ == "__main__":
    key = jax.random.PRNGKey(0)
    k_x, k_p = jax.random.split(key)

    B = 8
    x = jax.random.normal(k_x, (B, IN_DIM), jnp.float32)
    params = init_params(k_p)
    prepped = prep_params(params)

    out = dumbnet_forward(x, prepped)
    out = jax.block_until_ready(out)

    ref = reference_forward(x, params)
    assert out.shape == (B, OUT_DIM)
    assert jnp.allclose(out, ref, atol=1e-4, rtol=1e-4), "mismatch vs JAX reference"

    print("KERNEL_OK")
</pallas_src>

<mosaic_0001>
module attributes {stable_mosaic.version = 11 : i64} {
  func.func @fc1_kernel(%arg0: i32, %arg1: memref<8x384xf32, #tpu.memory_space<vmem>>, %arg2: memref<384x128xf32, #tpu.memory_space<vmem>>, %arg3: memref<1x128xf32, #tpu.memory_space<vmem>>, %arg4: memref<8x128xf32, #tpu.memory_space<vmem>>, %arg5: memref<1x1x128xf32, #tpu.memory_space<vmem>>, %arg6: memref<1x1x128xf32, #tpu.memory_space<vmem>>) attributes {dimension_semantics = [#tpu.dimension_semantics<parallel>], iteration_bounds = array<i64: 1>, scalar_prefetch = 0 : i64, scratch_operands = 0 : i64, tpu.core_type = #tpu.core_type<tc>, window_params = [{transform_indices = @transform_0, window_bounds = array<i64: 8, 384>}, {pipeline_mode = #tpu.pipeline_mode<synchronous>, transform_indices = @transform_1, window_bounds = array<i64: 384, 128>}, {pipeline_mode = #tpu.pipeline_mode<synchronous>, transform_indices = @transform_2, window_bounds = array<i64: 1, 128>}, {transform_indices = @transform_3, window_bounds = array<i64: 8, 128>}, {transform_indices = @transform_4, window_bounds = array<i64: 1, 1, 128>}, {transform_indices = @transform_5, window_bounds = array<i64: 1, 1, 128>}]} {
    %c0 = arith.constant 0 : index
    %c0_0 = arith.constant 0 : index
    %0 = vector.load %arg1[%c0, %c0_0] : memref<8x384xf32, #tpu.memory_space<vmem>>, vector<8x384xf32>
    %c0_1 = arith.constant 0 : index
    %c0_2 = arith.constant 0 : index
    %1 = vector.load %arg2[%c0_1, %c0_2] : memref<384x128xf32, #tpu.memory_space<vmem>>, vector<384x128xf32>
    %cst = arith.constant dense<0.000000e+00> : vector<8x128xf32>
    %2 = tpu.matmul %0, %1, %cst {dimension_numbers = #tpu.dot_dimension_numbers<[1], [0], [0], [1], [0, 0, 1, 1], [], []>} : vector<8x384xf32>, vector<384x128xf32>, vector<8x128xf32> -> vector<8x128xf32>
    %c0_3 = arith.constant 0 : index
    %c0_4 = arith.constant 0 : index
    %3 = vector.load %arg3[%c0_3, %c0_4] : memref<1x128xf32, #tpu.memory_space<vmem>>, vector<1x128xf32>
    %4 = vector.broadcast %3 : vector<1x128xf32> to vector<8x128xf32>
    %5 = arith.addf %2, %4 : vector<8x128xf32>
    %cst_5 = arith.constant 0.000000e+00 : f32
    %6 = vector.broadcast %cst_5 : f32 to vector<8x128xf32>
    %7 = arith.maximumf %5, %6 : vector<8x128xf32>
    %c0_6 = arith.constant 0 : index
    %c0_7 = arith.constant 0 : index
    %8 = vector.load %arg4[%c0_6, %c0_7] : memref<8x128xf32, #tpu.memory_space<vmem>>, vector<8x128xf32>
    tpu.vector_store %arg4[%c0_6, %c0_7], %7 {strides = array<i32>} : memref<8x128xf32, #tpu.memory_space<vmem>>, vector<8x128xf32>,
    %c8_i32 = arith.constant 8 : i32
    %9 = arith.muli %arg0, %c8_i32 : i32
    %10 = tpu.iota {dimensions = array<i32: 0>} : vector<8x1xi32>
    %11 = vector.broadcast %9 : i32 to vector<8x1xi32>
    %12 = arith.addi %11, %10 : vector<8x1xi32>
    %c8_i32_8 = arith.constant 8 : i32
    %13 = vector.broadcast %c8_i32_8 : i32 to vector<8x1xi32>
    %14 = arith.cmpi slt, %12, %13 : vector<8x1xi32>
    %15 = arith.extui %14 : vector<8x1xi1> to vector<8x1xi32>
    %16 = arith.sitofp %15 : vector<8x1xi32> to vector<8x1xf32>
    %17 = vector.broadcast %16 : vector<8x1xf32> to vector<8x128xf32>
    %18 = arith.mulf %7, %17 : vector<8x128xf32>
    %cst_9 = arith.constant dense<0.000000e+00> : vector<128xf32>
    %19 = vector.multi_reduction <add>, %18, %cst_9 [0] : vector<8x128xf32> to vector<128xf32>
    %20 = vector.shape_cast %19 : vector<128xf32> to vector<1x128xf32>
    %21 = vector.shape_cast %20 : vector<1x128xf32> to vector<1x1x128xf32>
    %c0_10 = arith.constant 0 : index
    %c0_11 = arith.constant 0 : index
    %c0_12 = arith.constant 0 : index
    %22 = vector.load %arg5[%c0_10, %c0_11, %c0_12] : memref<1x1x128xf32, #tpu.memory_space<vmem>>, vector<1x1x128xf32>
    tpu.vector_store %arg5[%c0_10, %c0_11, %c0_12], %21 {strides = array<i32>} : memref<1x1x128xf32, #tpu.memory_space<vmem>>, vector<1x1x128xf32>,
    %23 = arith.mulf %18, %7 : vector<8x128xf32>
    %cst_13 = arith.constant dense<0.000000e+00> : vector<128xf32>
    %24 = vector.multi_reduction <add>, %23, %cst_13 [0] : vector<8x128xf32> to vector<128xf32>
    %25 = vector.shape_cast %24 : vector<128xf32> to vector<1x128xf32>
    %26 = vector.shape_cast %25 : vector<1x128xf32> to vector<1x1x128xf32>
    %c0_14 = arith.constant 0 : index
    %c0_15 = arith.constant 0 : index
    %c0_16 = arith.constant 0 : index
    %27 = vector.load %arg6[%c0_14, %c0_15, %c0_16] : memref<1x1x128xf32, #tpu.memory_space<vmem>>, vector<1x1x128xf32>
    tpu.vector_store %arg6[%c0_14, %c0_15, %c0_16], %26 {strides = array<i32>} : memref<1x1x128xf32, #tpu.memory_space<vmem>>, vector<1x1x128xf32>,
    return
  }
  func.func @transform_0(%arg0: i32) -> (i32, i32) {
    %c0_i32 = arith.constant 0 : i32
    %c0_i32_0 = arith.constant 0 : i32
    return %arg0, %c0_i32 : i32, i32
  }
  func.func @transform_1(%arg0: i32) -> (i32, i32) {
    %c0_i32 = arith.constant 0 : i32
    %c0_i32_0 = arith.constant 0 : i32
    %c0_i32_1 = arith.constant 0 : i32
    return %c0_i32, %c0_i32_0 : i32, i32
  }
  func.func @transform_2(%arg0: i32) -> (i32, i32) {
    %c0_i32 = arith.constant 0 : i32
    %c0_i32_0 = arith.constant 0 : i32
    %c0_i32_1 = arith.constant 0 : i32
    return %c0_i32, %c0_i32_0 : i32, i32
  }
  func.func @transform_3(%arg0: i32) -> (i32, i32) {
    %c0_i32 = arith.constant 0 : i32
    %c0_i32_0 = arith.constant 0 : i32
    return %arg0, %c0_i32 : i32, i32
  }
  func.func @transform_4(%arg0: i32) -> (i32, i32, i32) {
    %c0_i32 = arith.constant 0 : i32
    %c0_i32_0 = arith.constant 0 : i32
    %c0_i32_1 = arith.constant 0 : i32
    return %arg0, %c0_i32, %c0_i32_0 : i32, i32, i32
  }
  func.func @transform_5(%arg0: i32) -> (i32, i32, i32) {
    %c0_i32 = arith.constant 0 : i32
    %c0_i32_0 = arith.constant 0 : i32
    %c0_i32_1 = arith.constant 0 : i32
    return %arg0, %c0_i32, %c0_i32_0 : i32, i32, i32
  }
}

</mosaic_0001>

<llo_original>
// kernel: tpu_custom_call.1
$region0: #{tpu_custom_call.1}
  #allocation0 [shape = 'u32[]', space=smem, size = 0x4, offset = 0x4, fixed_abs, tag = 'smem constant byte address 0x4 - core index']
  #allocation1 [shape = 'u32[144,128]{1,0:T(1,128)}', space=vmem, size = 0x12000, scoped, tag = 'internal scratch']
  %s0 = inlined_call_operand.hbm [shape: f32[8,384], index: 0, kind: input, shape index: {}]
  %s1 = inlined_call_operand.hbm [shape: f32[384,128], index: 1, kind: input, shape index: {}]
  %s2 = inlined_call_operand.vmem [shape: f32[1,128], index: 2, kind: input, shape index: {}]
  %s3 = inlined_call_operand.hbm [shape: f32[8,128], index: 3, kind: output, shape index: {0}]
  %s4 = inlined_call_operand.hbm [shape: f32[1,1,128], index: 4, kind: output, shape index: {1}]
  %s5 = inlined_call_operand.hbm [shape: f32[1,1,128], index: 5, kind: output, shape index: {2}]
  %6 = xla_tuple %s3, %s4, %s5
  %s7 = sld [smem:[#allocation0]]
  $region46: #{tpu_custom_call.1} parent=0
    _
  %s9 = ssub.s32 1, %s7
  %s10 = scalar_select 0, %s9, %s7
  $region1: #{tpu_custom_call.1} parent=0
    #allocation2 [shape = 'u8[12288]{0}', space=vmem, size = 0x3000, scoped, tag = 'input window, operand 0, single buffered']
    #allocation3 [shape = 's32[1]{0}', space=sflag, size = 0x4, scoped, tag = 'scoped memory for tpu_custom_call.1']
    #allocation4 [shape = 's32[1]{0}', space=sflag, size = 0x4, scoped, tag = 'scoped memory for tpu_custom_call.1']
    #allocation5 [shape = 'u8[196608]{0}', space=vmem, size = 0x30000, scoped, tag = 'input window, operand 1, single buffered']
    #allocation6 [shape = 's32[1]{0}', space=sflag, size = 0x4, scoped, tag = 'scoped memory for tpu_custom_call.1']
    #allocation7 [shape = 'u8[4096]{0}', space=vmem, size = 0x1000, scoped, tag = 'output window, operand 0, single buffered']
    #allocation8 [shape = 'u8[512]{0}', space=vmem, size = 0x400, scoped, tag = 'output window, operand 1, single buffered']
    #allocation9 [shape = 's32[1]{0}', space=sflag, size = 0x4, scoped, tag = 'scoped memory for tpu_custom_call.1']
    #allocation10 [shape = 'u8[512]{0}', space=vmem, size = 0x400, scoped, tag = 'output window, operand 2, single buffered']
    %11 = vsyncpa [#allocation3], 0
    %12 = vsyncpa [#allocation6], 0
    %13 = vsyncpa [#allocation4], 0
    %14 = vsyncpa [#allocation9], 0
    // Predicated region
    $region2: #{tpu_custom_call.1} parent=1 // pred_check
      _
    $region3: #{tpu_custom_call.1} parent=1 // pred_check_branch
      %16 = sbr.rel (0) target = $region5
    $region4: #{tpu_custom_call.1} parent=1 // pred_region
      %s18 = ssub.s32 384, 384
      %19 = vsyncadd [#allocation3], %s18
      %s21 = sshll.u32 [#allocation2], 4
      %s22 = int_to_ptr.vmem [resolvable:$true] %s21
      %24 = dma.hbm_to_vmem [thread:$0]  %s0, 384, %s22, [#allocation3]
    $region5: #{tpu_custom_call.1} parent=1 // pred_fallthru
      _
    // Predicated region
    $region6: #{tpu_custom_call.1} parent=1 // pred_check
      _
    $region7: #{tpu_custom_call.1} parent=1 // pred_check_branch
      %26 = sbr.rel (0) target = $region9
    $region8: #{tpu_custom_call.1} parent=1 // pred_region
      %s28 = ssub.s32 6144, 6144
      %29 = vsyncadd [#allocation6], %s28
      %s30 = sshll.u32 [#allocation5], 4
      %s31 = int_to_ptr.vmem [resolvable:$true] %s30
      %36 = dma.hbm_to_vmem [thread:$0]  %s1, 6144, %s31, [#allocation6], 128, 128, 8
    $region9: #{tpu_custom_call.1} parent=1 // pred_fallthru
      _
    // Predicated region
    $region10: #{tpu_custom_call.1} parent=1 // pred_check
      _
    $region11: #{tpu_custom_call.1} parent=1 // pred_check_branch
      %38 = sbr.rel (0) target = $region13
    $region12: #{tpu_custom_call.1} parent=1 // pred_region
      _
    $region13: #{tpu_custom_call.1} parent=1 // pred_fallthru
      _
    // Predicated region
    $region14: #{tpu_custom_call.1} parent=1 // pred_check
      _
    $region15: #{tpu_custom_call.1} parent=1 // pred_check_branch
      %40 = sbr.rel (0) target = $region17
    $region16: #{tpu_custom_call.1} parent=1 // pred_region
      %41 = dma.done [#allocation3], 384
    $region17: #{tpu_custom_call.1} parent=1 // pred_fallthru
      _
    // Predicated region
    $region18: #{tpu_custom_call.1} parent=1 // pred_check
      _
    $region19: #{tpu_custom_call.1} parent=1 // pred_check_branch
      %43 = sbr.rel (0) target = $region21
    $region20: #{tpu_custom_call.1} parent=1 // pred_region
      %44 = dma.done [#allocation6], 6144
    $region21: #{tpu_custom_call.1} parent=1 // pred_fallthru
      _
    %v45 = vld [vmem:[#allocation2] sm:$0xff]
    %v46 = vld [vmem:[#allocation2 + $0x8] sm:$0xff]
    %v47 = vld [vmem:[#allocation2 + $0x10] sm:$0xff]
    %v48 = vld [vmem:[#allocation5] sm:$0xff]
    %v49 = vld [vmem:[#allocation5 + $0x8] sm:$0xff]
    %v50 = vld [vmem:[#allocation5 + $0x10] sm:$0xff]
    %v51 = vld [vmem:[#allocation5 + $0x18] sm:$0xff]
    %v52 = vld [vmem:[#allocation5 + $0x20] sm:$0xff]
    %v53 = vld [vmem:[#allocation5 + $0x28] sm:$0xff]
    %v54 = vld [vmem:[#allocation5 + $0x30] sm:$0xff]
    %v55 = vld [vmem:[#allocation5 + $0x38] sm:$0xff]
    %v56 = vld [vmem:[#allocation5 + $0x40] sm:$0xff]
    %v57 = vld [vmem:[#allocation5 + $0x48] sm:$0xff]
    %v58 = vld [vmem:[#allocation5 + $0x50] sm:$0xff]
    %v59 = vld [vmem:[#allocation5 + $0x58] sm:$0xff]
    %v60 = vld [vmem:[#allocation5 + $0x60] sm:$0xff]
    %v61 = vld [vmem:[#allocation5 + $0x68] sm:$0xff]
    %v62 = vld [vmem:[#allocation5 + $0x70] sm:$0xff]
    %v63 = vld [vmem:[#allocation5 + $0x78] sm:$0xff]
    %v64 = vld [vmem:[#allocation5 + $0x80] sm:$0xff]
    %v65 = vld [vmem:[#allocation5 + $0x88] sm:$0xff]
    %v66 = vld [vmem:[#allocation5 + $0x90] sm:$0xff]
    %v67 = vld [vmem:[#allocation5 + $0x98] sm:$0xff]
    %v68 = vld [vmem:[#allocation5 + $0xa0] sm:$0xff]
    %v69 = vld [vmem:[#allocation5 + $0xa8] sm:$0xff]
    %v70 = vld [vmem:[#allocation5 + $0xb0] sm:$0xff]
    %v71 = vld [vmem:[#allocation5 + $0xb8] sm:$0xff]
    %v72 = vld [vmem:[#allocation5 + $0xc0] sm:$0xff]
    %v73 = vld [vmem:[#allocation5 + $0xc8] sm:$0xff]
    %v74 = vld [vmem:[#allocation5 + $0xd0] sm:$0xff]
    %v75 = vld [vmem:[#allocation5 + $0xd8] sm:$0xff]
    %v76 = vld [vmem:[#allocation5 + $0xe0] sm:$0xff]
    %v77 = vld [vmem:[#allocation5 + $0xe8] sm:$0xff]
    %v78 = vld [vmem:[#allocation5 + $0xf0] sm:$0xff]
    %v79 = vld [vmem:[#allocation5 + $0xf8] sm:$0xff]
    %v80 = vld [vmem:[#allocation5 + $0x100] sm:$0xff]
    %v81 = vld [vmem:[#allocation5 + $0x108] sm:$0xff]
    %v82 = vld [vmem:[#allocation5 + $0x110] sm:$0xff]
    %v83 = vld [vmem:[#allocation5 + $0x118] sm:$0xff]
    %v84 = vld [vmem:[#allocation5 + $0x120] sm:$0xff]
    %v85 = vld [vmem:[#allocation5 + $0x128] sm:$0xff]
    %v86 = vld [vmem:[#allocation5 + $0x130] sm:$0xff]
    %v87 = vld [vmem:[#allocation5 + $0x138] sm:$0xff]
    %v88 = vld [vmem:[#allocation5 + $0x140] sm:$0xff]
    %v89 = vld [vmem:[#allocation5 + $0x148] sm:$0xff]
    %v90 = vld [vmem:[#allocation5 + $0x150] sm:$0xff]
    %v91 = vld [vmem:[#allocation5 + $0x158] sm:$0xff]
    %v92 = vld [vmem:[#allocation5 + $0x160] sm:$0xff]
    %v93 = vld [vmem:[#allocation5 + $0x168] sm:$0xff]
    %v94 = vld [vmem:[#allocation5 + $0x170] sm:$0xff]
    %v95 = vld [vmem:[#allocation5 + $0x178] sm:$0xff]
    %v96 = vld [vmem:[%s2] sm:$0x1]
    %v98 = vlaneseq
    %v99 = vshrl.u32 %v98, 7
    %v100 = vsub.s32 0, %v99
    %v101 = vrot.slane %v96, %v100
    %103 = vmatprep.subr.mxu0 0.0
    %104 = vmatpush1.msra.mxu0 %v48
    %105 = vmatprep.subr.mxu0 0.0
    %106 = vmatpush1.msra.mxu0 %v49
    %107 = vmatprep.subr.mxu0 0.0
    %108 = vmatpush1.msra.mxu0 %v50
    %109 = vmatprep.subr.mxu0 0.0
    %110 = vmatpush1.msra.mxu0 %v51
    %111 = vmatprep.subr.mxu0 0.0
    %112 = vmatpush1.msra.mxu0 %v52
    %113 = vmatprep.subr.mxu0 0.0
    %114 = vmatpush1.msra.mxu0 %v53
    %115 = vmatprep.subr.mxu0 0.0
    %116 = vmatpush1.msra.mxu0 %v54
    %117 = vmatprep.subr.mxu0 0.0
    %118 = vmatpush1.msra.mxu0 %v55
    %119 = vmatprep.subr.mxu0 0.0
    %120 = vmatpush1.msra.mxu0 %v56
    %121 = vmatprep.subr.mxu0 0.0
    %122 = vmatpush1.msra.mxu0 %v57
    %123 = vmatprep.subr.mxu0 0.0
    %124 = vmatpush1.msra.mxu0 %v58
    %125 = vmatprep.subr.mxu0 0.0
    %126 = vmatpush1.msra.mxu0 %v59
    %127 = vmatprep.subr.mxu0 0.0
    %128 = vmatpush1.msra.mxu0 %v60
    %129 = vmatprep.subr.mxu0 0.0
    %130 = vmatpush1.msra.mxu0 %v61
    %131 = vmatprep.subr.mxu0 0.0
    %132 = vmatpush1.msra.mxu0 %v62
    %133 = vmatprep.subr.mxu0 0.0
    %134 = vmatpush1.msra.mxu0 %v63
    %135 = vmatprep.subr.mxu0 0.0
    %136 = vmatpush1.msra.mxu0 %v64
    %137 = vmatprep.subr.mxu0 0.0
    %138 = vmatpush1.msra.mxu0 %v65
    %139 = vmatprep.subr.mxu0 0.0
    %140 = vmatpush1.msra.mxu0 %v66
    %141 = vmatprep.subr.mxu0 0.0
    %142 = vmatpush1.msra.mxu0 %v67
    %143 = vmatprep.subr.mxu0 0.0
    %144 = vmatpush1.msra.mxu0 %v68
    %145 = vmatprep.subr.mxu0 0.0
    %146 = vmatpush1.msra.mxu0 %v69
    %147 = vmatprep.subr.mxu0 0.0
    %148 = vmatpush1.msra.mxu0 %v70
    %149 = vmatprep.subr.mxu0 0.0
    %150 = vmatpush1.msra.mxu0 %v71
    %151 = vmatprep.subr.mxu0 0.0
    %152 = vmatpush1.msra.mxu0 %v72
    %153 = vmatprep.subr.mxu0 0.0
    %154 = vmatpush1.msra.mxu0 %v73
    %155 = vmatprep.subr.mxu0 0.0
    %156 = vmatpush1.msra.mxu0 %v74
    %157 = vmatprep.subr.mxu0 0.0
    %158 = vmatpush1.msra.mxu0 %v75
    %159 = vmatprep.subr.mxu0 0.0
    %160 = vmatpush1.msra.mxu0 %v76
    %161 = vmatprep.subr.mxu0 0.0
    %162 = vmatpush1.msra.mxu0 %v77
    %163 = vmatprep.subr.mxu0 0.0
    %164 = vmatpush1.msra.mxu0 %v78
    %165 = vmatprep.subr.mxu0 0.0
    %166 = vmatpush1.msra.mxu0 %v79
    %167 = vmatprep.mubr.f32.mxu0 %v46
    %168 = vmatmul.mubr.f32.gmra.mrb[0].mxu0 %v45
    %v169 = vpop.f32.mrb[0].mxu0
    %v170 = vadd.f32 %v101, %v169
    %v171 = vpop.f32.mrb[0].mxu0
    %172 = vdwg.mxu0
    %173 = vmatprep.subr.mxu0 0.0
    %174 = vmatpush1.msra.mxu0 %v80
    %175 = vmatprep.subr.mxu0 0.0
    %176 = vmatpush1.msra.mxu0 %v81
    %177 = vmatprep.subr.mxu0 0.0
    %178 = vmatpush1.msra.mxu0 %v82
    %179 = vmatprep.subr.mxu0 0.0
    %180 = vmatpush1.msra.mxu0 %v83
    %181 = vmatprep.subr.mxu0 0.0
    %182 = vmatpush1.msra.mxu0 %v84
    %183 = vmatprep.subr.mxu0 0.0
    %184 = vmatpush1.msra.mxu0 %v85
    %185 = vmatprep.subr.mxu0 0.0
    %186 = vmatpush1.msra.mxu0 %v86
    %187 = vmatprep.subr.mxu0 0.0
    %188 = vmatpush1.msra.mxu0 %v87
    %189 = vmatprep.subr.mxu0 0.0
    %190 = vmatpush1.msra.mxu0 %v88
    %191 = vmatprep.subr.mxu0 0.0
    %192 = vmatpush1.msra.mxu0 %v89
    %193 = vmatprep.subr.mxu0 0.0
    %194 = vmatpush1.msra.mxu0 %v90
    %195 = vmatprep.subr.mxu0 0.0
    %196 = vmatpush1.msra.mxu0 %v91
    %197 = vmatprep.subr.mxu0 0.0
    %198 = vmatpush1.msra.mxu0 %v92
    %199 = vmatprep.subr.mxu0 0.0
    %200 = vmatpush1.msra.mxu0 %v93
    %201 = vmatprep.subr.mxu0 0.0
    %202 = vmatpush1.msra.mxu0 %v94
    %203 = vmatprep.subr.mxu0 0.0
    %204 = vmatpush1.msra.mxu0 %v95
    %205 = vmatprep.subr.mxu0 0.0
    %206 = vmatpush1.msra.mxu0 0.0
    %207 = vmatprep.subr.mxu0 0.0
    %208 = vmatpush1.msra.mxu0 0.0
    %209 = vmatprep.subr.mxu0 0.0
    %210 = vmatpush1.msra.mxu0 0.0
    %211 = vmatprep.subr.mxu0 0.0
    %212 = vmatpush1.msra.mxu0 0.0
    %213 = vmatprep.subr.mxu0 0.0
    %214 = vmatpush1.msra.mxu0 0.0
    %215 = vmatprep.subr.mxu0 0.0
    %216 = vmatpush1.msra.mxu0 0.0
    %217 = vmatprep.subr.mxu0 0.0
    %218 = vmatpush1.msra.mxu0 0.0
    %219 = vmatprep.subr.mxu0 0.0
    %220 = vmatpush1.msra.mxu0 0.0
    %221 = vmatprep.subr.mxu0 0.0
    %222 = vmatpush1.msra.mxu0 0.0
    %223 = vmatprep.subr.mxu0 0.0
    %224 = vmatpush1.msra.mxu0 0.0
    %225 = vmatprep.subr.mxu0 0.0
    %226 = vmatpush1.msra.mxu0 0.0
    %227 = vmatprep.subr.mxu0 0.0
    %228 = vmatpush1.msra.mxu0 0.0
    %229 = vmatprep.subr.mxu0 0.0
    %230 = vmatpush1.msra.mxu0 0.0
    %231 = vmatprep.subr.mxu0 0.0
    %232 = vmatpush1.msra.mxu0 0.0
    %233 = vmatprep.subr.mxu0 0.0
    %234 = vmatpush1.msra.mxu0 0.0
    %235 = vmatprep.subr.mxu0 0.0
    %236 = vmatpush1.msra.mxu0 0.0
    %237 = vmatprep.mubr.f32.mxu0 0.0
    %238 = vmatmul.mubr.f32.gmra.mrb[0].mxu0 %v47
    %v239 = vpop.f32.mrb[0].mxu0
    %v240 = vadd.f32 %v170, %v239
    %v241 = vpop.f32.mrb[0].mxu0
    %242 = vdwg.mxu0
    %v243 = vmax.f32 %v240, 0.0
    %244 = vst [vmem:[#allocation7] sm:$0xff] %v243
    %s245 = smul.u32 0, 8
    %v246 = vlaneseq
    %v247 = vshrl.u32 %v246, 7
    %v248 = vstv %s245
    %v249 = vadd.s32 %v248, %v247
    %vm250 = vcmp.lt.s32.totalorder %v249, 8
    %v251 = vsel %vm250, 1, 0
    %v252 = vcvt.s32.f32 %v251
    %v253 = vmul.f32 %v243, %v252
    %v254 = vrot.slane %v253, 4
    %v255 = vadd.f32 %v253, %v254
    %v256 = vrot.slane %v255, 2
    %v257 = vadd.f32 %v255, %v256
    %v258 = vrot.slane %v257, 1
    %v259 = vadd.f32 %v257, %v258
    %260 = vst [vmem:[#allocation8] sm:$0x1] %v259
    %v261 = vmul.f32 %v253, %v243
    %v262 = vrot.slane %v261, 4
    %v263 = vadd.f32 %v261, %v262
    %v264 = vrot.slane %v263, 2
    %v265 = vadd.f32 %v263, %v264
    %v266 = vrot.slane %v265, 1
    %v267 = vadd.f32 %v265, %v266
    %268 = vst [vmem:[#allocation10] sm:$0x1] %v267
    // Predicated region
    $region22: #{tpu_custom_call.1} parent=1 // pred_check
      _
    $region23: #{tpu_custom_call.1} parent=1 // pred_check_branch
      %270 = sbr.rel (0) target = $region25
    $region24: #{tpu_custom_call.1} parent=1 // pred_region
      %s272 = ssub.s32 128, 128
      %273 = vsyncadd [#allocation4], %s272
      %s275 = sshll.u32 [#allocation7], 4
      %s276 = int_to_ptr.vmem [resolvable:$true] %s275
      %278 = dma.vmem_to_hbm [thread:$0]  %s276, 128, %s3, [#allocation4]
    $region25: #{tpu_custom_call.1} parent=1 // pred_fallthru
      _
    // Predicated region
    $region26: #{tpu_custom_call.1} parent=1 // pred_check
      _
    $region27: #{tpu_custom_call.1} parent=1 // pred_check_branch
      %280 = sbr.rel (0) target = $region29
    $region28: #{tpu_custom_call.1} parent=1 // pred_region
      %s282 = ssub.s32 16, 16
      %283 = vsyncadd [#allocation9], %s282
      %s285 = sshll.u32 [#allocation8], 4
      %s286 = int_to_ptr.vmem [resolvable:$true] %s285
      %288 = dma.vmem_to_hbm [thread:$0]  %s286, 16, %s4, [#allocation9]
    $region29: #{tpu_custom_call.1} parent=1 // pred_fallthru
      _
    // Predicated region
    $region30: #{tpu_custom_call.1} parent=1 // pred_check
      _
    $region31: #{tpu_custom_call.1} parent=1 // pred_check_branch
      %290 = sbr.rel (0) target = $region33
    $region32: #{tpu_custom_call.1} parent=1 // pred_region
      %s292 = ssub.s32 16, 16
      %293 = vsyncadd [#allocation9], %s292
      %s295 = sshll.u32 [#allocation10], 4
      %s296 = int_to_ptr.vmem [resolvable:$true] %s295
      %298 = dma.vmem_to_hbm [thread:$0]  %s296, 16, %s5, [#allocation9]
    $region33: #{tpu_custom_call.1} parent=1 // pred_fallthru
      _
    // Predicated region
    $region34: #{tpu_custom_call.1} parent=1 // pred_check
      _
    $region35: #{tpu_custom_call.1} parent=1 // pred_check_branch
      %300 = sbr.rel (0) target = $region37
    $region36: #{tpu_custom_call.1} parent=1 // pred_region
      %301 = dma.done [#allocation4], 128
    $region37: #{tpu_custom_call.1} parent=1 // pred_fallthru
      _
    // Predicated region
    $region38: #{tpu_custom_call.1} parent=1 // pred_check
      _
    $region39: #{tpu_custom_call.1} parent=1 // pred_check_branch
      %303 = sbr.rel (0) target = $region41
    $region40: #{tpu_custom_call.1} parent=1 // pred_region
      %304 = dma.done [#allocation9], 16
    $region41: #{tpu_custom_call.1} parent=1 // pred_fallthru
      _
    // Predicated region
    $region42: #{tpu_custom_call.1} parent=1 // pred_check
      _
    $region43: #{tpu_custom_call.1} parent=1 // pred_check_branch
      %306 = sbr.rel (0) target = $region45
    $region44: #{tpu_custom_call.1} parent=1 // pred_region
      %307 = dma.done [#allocation9], 16
    $region45: #{tpu_custom_call.1} parent=1 // pred_fallthru
      _
    %308 = vsyncpa [#allocation3], 1
    %309 = vsyncpa [#allocation6], 1
    %310 = vsyncpa [#allocation4], 1
    %311 = vsyncpa [#allocation9], 1

</llo_original>
